<compile_context>
chip_gen: v5e
topology: v5e:2x2
jax: 0.10.0
libtpu: 0.0.40
codegen_flags: <defaults>
</compile_context>

<pallas_src>
import jax
import jax.numpy as jnp
from jax.experimental import pallas as pl
from jax.experimental.pallas import tpu as pltpu


def _stretch_matmul_kernel(x_ref, e_ref, o_ref):
    # x_ref: (r_t, g*w) grouped input rows (native dtype)
    # e_ref: (g*w, n_t) slice of the constant 0/1 block-diagonal expansion matrix
    # o_ref: (r_t, n_t) expanded output rows
    # Padded rows of a partial last block do garbage MACs; rows are independent
    # and Pallas masks the writeback, so this is harmless.
    o_ref[...] = jnp.dot(
        x_ref[...], e_ref[...], preferred_element_type=jnp.float32
    ).astype(o_ref.dtype)


def _round_up(a: int, b: int) -> int:
    return (a + b - 1) // b * b


def _pad(v: int, m: int) -> int:
    return _round_up(max(int(v), 1), m)


def _vmem_capacity_bytes() -> int:
    try:
        return int(pltpu.get_tpu_info().vmem_capacity_bytes)
    except Exception:
        return 64 * 1024 * 1024  # conservative (v7x per-core) fallback


def _choose_group(R: int, w: int, K: int, e_itemsize: int,
                  e_budget_bytes: int = 8 << 20) -> int:
    """Pick g | R so the block-diagonal E (g*w x g*K) gives lane-dense blocks."""
    best_g, best_score = 1, None
    for g in range(1, min(R, 256) + 1):
        if R % g:
            continue
        gw, gK = g * w, g * K
        if g > 1 and gw * gK * e_itemsize > e_budget_bytes:
            continue
        score = (
            1 if gK % 128 == 0 else 0,   # unmasked, lane-dense output stores
            1 if gw >= 128 else 0,       # fill MXU contraction / input lanes
            1 if gw <= 256 else 0,       # bound E size / wasted MACs
            -gw,
        )
        if best_score is None or score > best_score:
            best_g, best_score = g, score
    return best_g


def _need_bytes(r_t: int, n_t: int, gw: int, itemsize: int, sub: int) -> int:
    # Physical (lane/sublane padded) VMEM: double-buffered x / E / out blocks
    # plus the f32 matmul intermediate.
    x_blk = _pad(r_t, sub) * _pad(gw, 128) * itemsize
    e_blk = _pad(gw, 8) * _pad(n_t, 128) * itemsize
    o_blk = _pad(r_t, sub) * _pad(n_t, 128) * itemsize
    acc = _pad(r_t, 8) * _pad(n_t, 128) * 4
    return 2 * (x_blk + e_blk + o_blk) + acc


def stretch2d(x: jax.Array, x_scale: int, y_scale: int) -> jax.Array:
    """Pallas equivalent of Stretch2d.forward for NCHW input."""
    b, c, h, w = x.shape
    H, W = h * y_scale, w * x_scale
    if x_scale == 1 and y_scale == 1:
        return x
    if x.size == 0:
        return jnp.zeros((b, c, H, W), x.dtype)
    if x.dtype not in (jnp.float32, jnp.bfloat16, jnp.float16):
        # TODO(synk): integer / f64 inputs bypass the float-MXU path (rounding
        # would not be bit-exact); plain replication keeps the semantics.
        return jnp.repeat(jnp.repeat(x, y_scale, axis=2), x_scale, axis=3)

    K = y_scale * W          # merged (y_scale, W) output row width per input row
    R = b * c * h            # independent input rows
    itemsize = x.dtype.itemsize
    sub = {4: 8, 2: 16, 1: 32}.get(itemsize, 8)   # packed sublane count

    g = _choose_group(R, w, K, itemsize)
    gw, gK, Rg = g * w, g * K, R // g

    # Block-diagonal 0/1 expansion matrix, built in the INPUT dtype so bf16
    # inputs use the native bf16 MXU path (values are 0/1 -> exact).
    rows = jnp.arange(gw)
    cols = jnp.arange(gK)
    r_in, k_in = rows // w, rows % w
    r_out, j_out = cols // K, (cols % K) % W
    e = ((r_in[:, None] == r_out[None, :])
         & (k_in[:, None] == (j_out // x_scale)[None, :])).astype(x.dtype)

    # Per-generation VMEM budget / limit (128 MiB v5e/v6e, 64 MiB per-TC v7x).
    cap = _vmem_capacity_bytes()
    budget = min(int(cap * 0.45), 64 << 20)
    vmem_limit = max(32 << 20, int(cap * 0.75))

    # Column tile: whole merged width if it fits, else a multiple of 128 lanes.
    if gK <= 128 or _need_bytes(sub, gK, gw, itemsize, sub) <= budget:
        n_t = gK
    else:
        k_blk = 1
        while ((k_blk + 1) * 128 < gK
               and _need_bytes(sub, (k_blk + 1) * 128, gw, itemsize, sub) <= budget):
            k_blk += 1
        n_t = k_blk * 128
    # TODO(synk): for very large w (E ~ x_scale*w^2 elements starts to dominate
    # HBM traffic) switch to a y_scale-factored / contraction-tiled variant.

    # Row tile: biggest multiple of the packed-sublane count that fits budget.
    r_cap = min(Rg, 1024)
    r_t = sub
    while r_t + sub <= r_cap and _need_bytes(r_t + sub, n_t, gw, itemsize, sub) <= budget:
        r_t += sub
    r_t = min(r_t, Rg)

    # Keep a few balanced grid steps (megacore on v7x, pipeline overlap) without
    # shrinking blocks below one sublane tile.
    col_steps = pl.cdiv(gK, n_t)
    if Rg >= 4 * sub:
        desired = 4
    elif Rg >= 2 * sub:
        desired = 2
    else:
        desired = 1
    if pl.cdiv(Rg, r_t) * col_steps < desired:
        r_t = min(Rg, _round_up(pl.cdiv(Rg, desired), sub))

    grid = (pl.cdiv(Rg, r_t), pl.cdiv(gK, n_t))
    x_rows = x.reshape(Rg, gw)

    out_rows = pl.pallas_call(
        _stretch_matmul_kernel,
        out_shape=jax.ShapeDtypeStruct((Rg, gK), x.dtype),
        grid_spec=pltpu.PrefetchScalarGridSpec(
            num_scalar_prefetch=0,
            grid=grid,
            in_specs=[
                pl.BlockSpec((r_t, gw), lambda i, j: (i, 0)),
                pl.BlockSpec((gw, n_t), lambda i, j: (0, j)),
            ],
            out_specs=pl.BlockSpec((r_t, n_t), lambda i, j: (i, j)),
        ),
        compiler_params=pltpu.CompilerParams(
            dimension_semantics=("parallel", "parallel"),
            vmem_limit_bytes=vmem_limit,
        ),
        cost_estimate=pl.CostEstimate(
            flops=2 * Rg * gK * gw,
            transcendentals=0,
            bytes_accessed=(R * w + R * K + gw * gK) * itemsize,
        ),
    )(x_rows, e)

    # (Rg, gK) row-major == (b, c, h, y_scale, W) row-major == NCHW output.
    return out_rows.reshape(b, c, H, W)


if __name__ == "__main__":
    k0, k1, k2 = jax.random.split(jax.random.PRNGKey(0), 3)

    # Config A: f32, grouped merged width g*K = 1024 (fully lane-dense stores).
    xA = jax.random.normal(k0, (2, 4, 16, 16), dtype=jnp.float32)
    outA = jax.block_until_ready(stretch2d(xA, x_scale=4, y_scale=2))
    refA = jnp.repeat(jnp.repeat(xA, 2, axis=2), 4, axis=3)
    assert outA.shape == (2, 4, 32, 64), outA.shape
    assert outA.dtype == xA.dtype
    assert jnp.array_equal(outA, refA), "config A mismatch vs reference"

    # Config B: odd scales (K = 96 -> row grouping lifts it to a 128-multiple).
    xB = jax.random.normal(k1, (2, 4, 8, 16), dtype=jnp.float32)
    outB = jax.block_until_ready(stretch2d(xB, x_scale=2, y_scale=3))
    refB = jnp.repeat(jnp.repeat(xB, 3, axis=2), 2, axis=3)
    assert outB.shape == (2, 4, 24, 32), outB.shape
    assert outB.dtype == xB.dtype
    assert jnp.array_equal(outB, refB), "config B mismatch vs reference"

    # Config C: bf16 input stays on the native bf16 MXU path (still bit-exact).
    xC = jax.random.normal(k2, (2, 4, 16, 16), dtype=jnp.bfloat16)
    outC = jax.block_until_ready(stretch2d(xC, x_scale=2, y_scale=2))
    refC = jnp.repeat(jnp.repeat(xC, 2, axis=2), 2, axis=3)
    assert outC.shape == (2, 4, 32, 32), outC.shape
    assert outC.dtype == xC.dtype
    assert jnp.array_equal(outC, refC), "config C mismatch vs reference"

    print("KERNEL_OK")
</pallas_src>

<mosaic_0001>
module attributes {stable_mosaic.version = 11 : i64} {
  func.func @_stretch_matmul_kernel(%arg0: i32, %arg1: i32, %arg2: memref<8x128xf32, #tpu.memory_space<vmem>>, %arg3: memref<128x1024xf32, #tpu.memory_space<vmem>>, %arg4: memref<8x1024xf32, #tpu.memory_space<vmem>>) attributes {dimension_semantics = [#tpu.dimension_semantics<parallel>, #tpu.dimension_semantics<parallel>], iteration_bounds = array<i64: 2, 1>, scalar_prefetch = 0 : i64, scratch_operands = 0 : i64, tpu.core_type = #tpu.core_type<tc>, window_params = [{transform_indices = @transform_0, window_bounds = array<i64: 8, 128>}, {transform_indices = @transform_1, window_bounds = array<i64: 128, 1024>}, {transform_indices = @transform_2, window_bounds = array<i64: 8, 1024>}]} {
    %c0 = arith.constant 0 : index
    %c0_0 = arith.constant 0 : index
    %0 = vector.load %arg2[%c0, %c0_0] : memref<8x128xf32, #tpu.memory_space<vmem>>, vector<8x128xf32>
    %c0_1 = arith.constant 0 : index
    %c0_2 = arith.constant 0 : index
    %1 = vector.load %arg3[%c0_1, %c0_2] : memref<128x1024xf32, #tpu.memory_space<vmem>>, vector<128x1024xf32>
    %cst = arith.constant dense<0.000000e+00> : vector<8x1024xf32>
    %2 = tpu.matmul %0, %1, %cst {dimension_numbers = #tpu.dot_dimension_numbers<[1], [0], [0], [1], [0, 0, 1, 1], [], []>} : vector<8x128xf32>, vector<128x1024xf32>, vector<8x1024xf32> -> vector<8x1024xf32>
    %c0_3 = arith.constant 0 : index
    %c0_4 = arith.constant 0 : index
    %3 = vector.load %arg4[%c0_3, %c0_4] : memref<8x1024xf32, #tpu.memory_space<vmem>>, vector<8x1024xf32>
    tpu.vector_store %arg4[%c0_3, %c0_4], %2 {strides = array<i32>} : memref<8x1024xf32, #tpu.memory_space<vmem>>, vector<8x1024xf32>,
    return
  }
  func.func @transform_0(%arg0: i32, %arg1: i32) -> (i32, i32) {
    %c0_i32 = arith.constant 0 : i32
    %c0_i32_0 = arith.constant 0 : i32
    return %arg0, %c0_i32 : i32, i32
  }
  func.func @transform_1(%arg0: i32, %arg1: i32) -> (i32, i32) {
    %c0_i32 = arith.constant 0 : i32
    %c0_i32_0 = arith.constant 0 : i32
    return %c0_i32, %arg1 : i32, i32
  }
  func.func @transform_2(%arg0: i32, %arg1: i32) -> (i32, i32) {
    %c0_i32 = arith.constant 0 : i32
    return %arg0, %arg1 : i32, i32
  }
}

</mosaic_0001>

<llo_original>
// kernel: tpu_custom_call.1
$region0: #{tpu_custom_call.1}
  #allocation0 [shape = 'u32[]', space=smem, size = 0x4, offset = 0x4, fixed_abs, tag = 'smem constant byte address 0x4 - core index']
  #allocation1 [shape = 'u32[72,128]{1,0:T(1,128)}', space=vmem, size = 0x9000, scoped, tag = 'internal scratch']
  %s0 = inlined_call_operand.hbm [shape: f32[16,128], index: 0, kind: input, shape index: {}]
  %s1 = inlined_call_operand.hbm [shape: f32[128,1024], index: 1, kind: input, shape index: {}]
  %s2 = inlined_call_operand.hbm [shape: f32[16,1024], index: 2, kind: output, shape index: {}]
  %s3 = sld [smem:[#allocation0]]
  $region49: #{tpu_custom_call.1} parent=0
    _
  %s5 = ssub.s32 1, %s3
  %s6 = scalar_select 0, %s5, %s3
  $region1: #{tpu_custom_call.1} parent=0
    #allocation2 [shape = 'u8[8192]{0}', space=vmem, size = 0x2000, scoped, tag = 'input window, operand 0']
    #allocation3 [shape = 's32[2]{0}', space=sflag, size = 0x8, scoped, tag = 'scoped memory for tpu_custom_call.1']
    #allocation4 [shape = 's32[2]{0}', space=sflag, size = 0x8, scoped, tag = 'scoped memory for tpu_custom_call.1']
    #allocation5 [shape = 'u8[524288]{0}', space=vmem, size = 0x80000, scoped, tag = 'input window, operand 1, single buffered']
    #allocation6 [shape = 's32[1]{0}', space=sflag, size = 0x4, scoped, tag = 'scoped memory for tpu_custom_call.1']
    #allocation7 [shape = 'u8[65536]{0}', space=vmem, size = 0x10000, scoped, tag = 'output window, operand 0']
    %7 = vsyncpa [#allocation3], 0
    %s8 = scalar_lea.sflag [#allocation3], 1
    %9 = vsyncpa %s8, 0
    %10 = vsyncpa [#allocation6], 0
    %11 = vsyncpa [#allocation4], 0
    %s12 = scalar_lea.sflag [#allocation4], 1
    %13 = vsyncpa %s12, 0
    loop: start=0, step=1, limit=4
    $region2: #{tpu_custom_call.1} parent=1 // loop_pre_header
      _
    $region3: #{tpu_custom_call.1} parent=1 // loop_header
      %s15 = sphi 0, %s19
      %p16 = scmp.ge.s32.totalorder %s15, 4
      %s22 = sphi 0, %s34
      %s23 = sphi 0, %s30
      %s24 = sphi 0, %s22
      %s25 = sphi 0, %s23
      %s26 = sphi 0, %s24
      %s27 = sphi 0, %s25
      %s37 = sphi 0, %s39
      %s40 = sphi 0, %s37
      %s41 = sphi 0, %s40
      %s57 = sphi 0, %s41
      %s63 = sphi 0, %s65
      %s66 = sphi 0, %s63
      %s67 = sphi 0, %s66
      %s83 = sphi 0, %s67
      %s91 = sphi 0, %s93
      %s94 = sphi 0, %s91
      %s95 = sphi 0, %s94
      %s111 = sphi 0, %s95
    $region4: #{tpu_custom_call.1} parent=1 // loop_header_branch
      %18 = sbr.rel (%p16) target = $region8
    $region5: #{tpu_custom_call.1} parent=1 // loop_body
      %s20 = ssub.s32 %s15, 1
      %s21 = ssub.s32 %s15, 2
      %s28 = sadd.s32 1, %s23
      %p29 = scmp.ge.s32.totalorder %s28, 1
      %s30 = scalar_select %p29, 0, %s28
      %s31 = sadd.s32 1, %s22
      %s32 = scalar_select %p29, %s31, %s22
      %p33 = scmp.ge.s32.totalorder %s32, 2
      %s34 = scalar_select %p33, 0, %s32
      %s35 = ssub.s32 %s22, %s34
      %p36 = scmp.eq.s32.totalorder %s35, 0
      %s38 = sadd.s32 %s37, 1
      %s39 = scalar_select %p36, %s37, %s38
      %p42 = pneg %p36
      %p43 = scmp.eq.s32.totalorder %s15, 1
      %p44 = por %p42, %p43
      %p45 = scmp.ne.s32.totalorder %s37, %s40
      %p46 = scmp.eq.s32.totalorder %s15, 0
      %p47 = por %p45, %p46
      %p48 = scmp.ne.s32.totalorder %s37, %s40
      %p49 = scmp.eq.s32.totalorder %s20, 1
      %p50 = por %p48, %p49
      %p51 = scmp.ne.s32.totalorder %s40, %s41
      %p52 = scmp.eq.s32.totalorder %s20, 0
      %p53 = por %p51, %p52
      %p54 = scmp.ne.s32.totalorder %s40, %s41
      %p55 = scmp.eq.s32.totalorder %s21, 1
      %p56 = por %p54, %p55
      %p58 = scmp.ne.s32.totalorder %s41, %s57
      %p59 = scmp.eq.s32.totalorder %s21, 0
      %p60 = por %p58, %p59
      %s61 = ssub.s32 %s23, %s30
      %p62 = scmp.eq.s32.totalorder %s61, 0
      %s64 = sadd.s32 %s63, 1
      %s65 = scalar_select %p62, %s63, %s64
      %p68 = pneg %p62
      %p69 = scmp.eq.s32.totalorder %s15, 1
      %p70 = por %p68, %p69
      %p71 = scmp.ne.s32.totalorder %s63, %s66
      %p72 = scmp.eq.s32.totalorder %s15, 0
      %p73 = por %p71, %p72
      %p74 = scmp.ne.s32.totalorder %s63, %s66
      %p75 = scmp.eq.s32.totalorder %s20, 1
      %p76 = por %p74, %p75
      %p77 = scmp.ne.s32.totalorder %s66, %s67
      %p78 = scmp.eq.s32.totalorder %s20, 0
      %p79 = por %p77, %p78
      %p80 = scmp.ne.s32.totalorder %s66, %s67
      %p81 = scmp.eq.s32.totalorder %s21, 1
      %p82 = por %p80, %p81
      %p84 = scmp.ne.s32.totalorder %s67, %s83
      %p85 = scmp.eq.s32.totalorder %s21, 0
      %p86 = por %p84, %p85
      %s87 = ssub.s32 %s22, %s34
      %s88 = ssub.s32 %s23, %s30
      %s89 = sor.u32 %s87, %s88
      %p90 = scmp.eq.s32.totalorder %s89, 0
      %s92 = sadd.s32 %s91, 1
      %s93 = scalar_select %p90, %s91, %s92
      %p96 = pneg %p90
      %p97 = scmp.eq.s32.totalorder %s15, 1
      %p98 = por %p96, %p97
      %p99 = scmp.ne.s32.totalorder %s91, %s94
      %p100 = scmp.eq.s32.totalorder %s15, 0
      %p101 = por %p99, %p100
      %p102 = scmp.ne.s32.totalorder %s91, %s94
      %p103 = scmp.eq.s32.totalorder %s20, 1
      %p104 = por %p102, %p103
      %p105 = scmp.ne.s32.totalorder %s94, %s95
      %p106 = scmp.eq.s32.totalorder %s20, 0
      %p107 = por %p105, %p106
      %p108 = scmp.ne.s32.totalorder %s94, %s95
      %p109 = scmp.eq.s32.totalorder %s21, 1
      %p110 = por %p108, %p109
      %p112 = scmp.ne.s32.totalorder %s95, %s111
      %p113 = scmp.eq.s32.totalorder %s21, 0
      %p114 = por %p112, %p113
      %p115 = scmp.le.s32.totalorder 1, %s15
      %p116 = scmp.lt.s32.totalorder %s15, 3
      %p117 = pnand %p115, %p116
      %p118 = pneg %p117
      // Predicated region
      $region9: #{tpu_custom_call.1} parent=5 // pred_check
        _
      $region10: #{tpu_custom_call.1} parent=5 // pred_check_branch
        %120 = sbr.rel (%p117) target = $region12
      $region11: #{tpu_custom_call.1} parent=5 // pred_region
        %s121 = ssub.s32 %s15, 1
        // Predicated region
        $region13: #{tpu_custom_call.1} parent=11 // pred_check
          %p122 = pneg %p79
        $region14: #{tpu_custom_call.1} parent=11 // pred_check_branch
          %124 = sbr.rel (%p122) target = $region16
        $region15: #{tpu_custom_call.1} parent=11 // pred_region
          %s125 = smul.u32 8, %s25
          %127 = vsyncadd [#allocation6], 0
          %s128 = smul.addr %s125, 8
          %s129 = scalar_lea.hbm %s1, %s128
          %s130 = sshll.u32 %s129, 4
          %s131 = int_to_ptr.hbm [resolvable:$true] %s130
          %s132 = sshll.u32 [#allocation5], 4
          %s133 = int_to_ptr.vmem [resolvable:$true] %s132
          %138 = dma.hbm_to_vmem [thread:$0]  %s131, 16384, %s133, [#allocation6], 1024, 1024, 64
        $region16: #{tpu_custom_call.1} parent=11 // pred_fallthru
          _
      $region12: #{tpu_custom_call.1} parent=5 // pred_fallthru
        _
      %p139 = scmp.lt.s32.totalorder %s15, 2
      // Predicated region
      $region17: #{tpu_custom_call.1} parent=5 // pred_check
        %p140 = pneg %p139
      $region18: #{tpu_custom_call.1} parent=5 // pred_check_branch
        %142 = sbr.rel (%p140) target = $region20
      $region19: #{tpu_custom_call.1} parent=5 // pred_region
        // Predicated region
        $region21: #{tpu_custom_call.1} parent=19 // pred_check
          %p143 = pneg %p47
        $region22: #{tpu_custom_call.1} parent=19 // pred_check_branch
          %145 = sbr.rel (%p143) target = $region24
        $region23: #{tpu_custom_call.1} parent=19 // pred_region
          %s146 = sand.u32 %s37, 1
          %s147 = scalar_lea.sflag [#allocation3], %s146
          %s148 = sand.u32 %s37, 1
          %s149 = smul.addr %s148, 8
          %s150 = scalar_lea.vmem [#allocation2], %s149
          %152 = vsyncadd %s147, 0
          %s153 = smul.addr %s22, 8
          %s154 = scalar_lea.hbm %s0, %s153
          %s156 = sshll.u32 %s154, 4
          %s157 = int_to_ptr.hbm [resolvable:$true] %s156
          %s158 = sshll.u32 %s150, 4
          %s159 = int_to_ptr.vmem [resolvable:$true] %s158
          %161 = dma.hbm_to_vmem [thread:$0]  %s157, 128, %s159, %s147
        $region24: #{tpu_custom_call.1} parent=19 // pred_fallthru
          _
      $region20: #{tpu_custom_call.1} parent=5 // pred_fallthru
        _
      %p162 = scmp.le.s32.totalorder 1, %s15
      %p163 = scmp.lt.s32.totalorder %s15, 3
      %p164 = pnand %p162, %p163
      %p165 = pneg %p164
      // Predicated region
      $region25: #{tpu_custom_call.1} parent=5 // pred_check
        _
      $region26: #{tpu_custom_call.1} parent=5 // pred_check_branch
        %167 = sbr.rel (%p164) target = $region28
      $region27: #{tpu_custom_call.1} parent=5 // pred_region
        %s168 = ssub.s32 %s15, 1
        %s169 = sand.u32 %s40, 1
        %s170 = scalar_lea.sflag [#allocation3], %s169
        %s171 = sand.u32 %s40, 1
        %s172 = smul.addr %s171, 8
        %s173 = scalar_lea.vmem [#allocation2], %s172
        // Predicated region
        $region29: #{tpu_custom_call.1} parent=27 // pred_check
          %p174 = pneg %p53
        $region30: #{tpu_custom_call.1} parent=27 // pred_check_branch
          %176 = sbr.rel (%p174) target = $region32
        $region31: #{tpu_custom_call.1} parent=27 // pred_region
          %178 = dma.done %s170, 128
        $region32: #{tpu_custom_call.1} parent=27 // pred_fallthru
          _
        // Predicated region
        $region33: #{tpu_custom_call.1} parent=27 // pred_check
          %p179 = pneg %p79
        $region34: #{tpu_custom_call.1} parent=27 // pred_check_branch
          %181 = sbr.rel (%p179) target = $region36
        $region35: #{tpu_custom_call.1} parent=27 // pred_region
          %183 = dma.done [#allocation6], 16384
        $region36: #{tpu_custom_call.1} parent=27 // pred_fallthru
          _
        %s184 = sand.u32 %s40, 1
        %s185 = scalar_lea.sflag [#allocation3], %s184
        %s186 = sand.u32 %s40, 1
        %s187 = smul.addr %s186, 8
        %s188 = scalar_lea.vmem [#allocation2], %s187
        %p189 = pneg %p53
        %p190 = pneg %p50
        %p191 = pneg %p79
        %p192 = pneg %p76
        %p193 = pneg %p107
        %p194 = pneg %p104
        %s195 = sand.u32 %s94, 1
        %s196 = scalar_lea.sflag [#allocation4], %s195
        %s197 = sand.u32 %s94, 1
        %s198 = smul.addr %s197, 64
        %s199 = scalar_lea.vmem [#allocation7], %s198
        %s200 = smul.u32 8, %s25
        %s201 = smul.u32 8, %s25
        %v202 = vld [vmem:[%s173] sm:$0xff]
        %v203 = vld [vmem:[#allocation5] sm:$0xff]
        %v204 = vld [vmem:[#allocation5 + $0x8] sm:$0xff]
        %v205 = vld [vmem:[#allocation5 + $0x10] sm:$0xff]
        %v206 = vld [vmem:[#allocation5 + $0x18] sm:$0xff]
        %v207 = vld [vmem:[#allocation5 + $0x20] sm:$0xff]
        %v208 = vld [vmem:[#allocation5 + $0x28] sm:$0xff]
        %v209 = vld [vmem:[#allocation5 + $0x30] sm:$0xff]
        %v210 = vld [vmem:[#allocation5 + $0x38] sm:$0xff]
        %v211 = vld [vmem:[#allocation5 + $0x40] sm:$0xff]
        %v212 = vld [vmem:[#allocation5 + $0x48] sm:$0xff]
        %v213 = vld [vmem:[#allocation5 + $0x50] sm:$0xff]
        %v214 = vld [vmem:[#allocation5 + $0x58] sm:$0xff]
        %v215 = vld [vmem:[#allocation5 + $0x60] sm:$0xff]
        %v216 = vld [vmem:[#allocation5 + $0x68] sm:$0xff]
        %v217 = vld [vmem:[#allocation5 + $0x70] sm:$0xff]
        %v218 = vld [vmem:[#allocation5 + $0x78] sm:$0xff]
        %v219 = vld [vmem:[#allocation5 + $0x80] sm:$0xff]
        %v220 = vld [vmem:[#allocation5 + $0x88] sm:$0xff]
        %v221 = vld [vmem:[#allocation5 + $0x90] sm:$0xff]
        %v222 = vld [vmem:[#allocation5 + $0x98] sm:$0xff]
        %v223 = vld [vmem:[#allocation5 + $0xa0] sm:$0xff]
        %v224 = vld [vmem:[#allocation5 + $0xa8] sm:$0xff]
        %v225 = vld [vmem:[#allocation5 + $0xb0] sm:$0xff]
        %v226 = vld [vmem:[#allocation5 + $0xb8] sm:$0xff]
        %v227 = vld [vmem:[#allocation5 + $0xc0] sm:$0xff]
        %v228 = vld [vmem:[#allocation5 + $0xc8] sm:$0xff]
        %v229 = vld [vmem:[#allocation5 + $0xd0] sm:$0xff]
        %v230 = vld [vmem:[#allocation5 + $0xd8] sm:$0xff]
        %v231 = vld [vmem:[#allocation5 + $0xe0] sm:$0xff]
        %v232 = vld [vmem:[#allocation5 + $0xe8] sm:$0xff]
        %v233 = vld [vmem:[#allocation5 + $0xf0] sm:$0xff]
        %v234 = vld [vmem:[#allocation5 + $0xf8] sm:$0xff]
        %v235 = vld [vmem:[#allocation5 + $0x100] sm:$0xff]
        %v236 = vld [vmem:[#allocation5 + $0x108] sm:$0xff]
        %v237 = vld [vmem:[#allocation5 + $0x110] sm:$0xff]
        %v238 = vld [vmem:[#allocation5 + $0x118] sm:$0xff]
        %v239 = vld [vmem:[#allocation5 + $0x120] sm:$0xff]
        %v240 = vld [vmem:[#allocation5 + $0x128] sm:$0xff]
        %v241 = vld [vmem:[#allocation5 + $0x130] sm:$0xff]
        %v242 = vld [vmem:[#allocation5 + $0x138] sm:$0xff]
        %v243 = vld [vmem:[#allocation5 + $0x140] sm:$0xff]
        %v244 = vld [vmem:[#allocation5 + $0x148] sm:$0xff]
        %v245 = vld [vmem:[#allocation5 + $0x150] sm:$0xff]
        %v246 = vld [vmem:[#allocation5 + $0x158] sm:$0xff]
        %v247 = vld [vmem:[#allocation5 + $0x160] sm:$0xff]
        %v248 = vld [vmem:[#allocation5 + $0x168] sm:$0xff]
        %v249 = vld [vmem:[#allocation5 + $0x170] sm:$0xff]
        %v250 = vld [vmem:[#allocation5 + $0x178] sm:$0xff]
        %v251 = vld [vmem:[#allocation5 + $0x180] sm:$0xff]
        %v252 = vld [vmem:[#allocation5 + $0x188] sm:$0xff]
        %v253 = vld [vmem:[#allocation5 + $0x190] sm:$0xff]
        %v254 = vld [vmem:[#allocation5 + $0x198] sm:$0xff]
        %v255 = vld [vmem:[#allocation5 + $0x1a0] sm:$0xff]
        %v256 = vld [vmem:[#allocation5 + $0x1a8] sm:$0xff]
        %v257 = vld [vmem:[#allocation5 + $0x1b0] sm:$0xff]
        %v258 = vld [vmem:[#allocation5 + $0x1b8] sm:$0xff]
        %v259 = vld [vmem:[#allocation5 + $0x1c0] sm:$0xff]
        %v260 = vld [vmem:[#allocation5 + $0x1c8] sm:$0xff]
        %v261 = vld [vmem:[#allocation5 + $0x1d0] sm:$0xff]
        %v262 = vld [vmem:[#allocation5 + $0x1d8] sm:$0xff]
        %v263 = vld [vmem:[#allocation5 + $0x1e0] sm:$0xff]
        %v264 = vld [vmem:[#allocation5 + $0x1e8] sm:$0xff]
        %v265 = vld [vmem:[#allocation5 + $0x1f0] sm:$0xff]
        %v266 = vld [vmem:[#allocation5 + $0x1f8] sm:$0xff]
        %v267 = vld [vmem:[#allocation5 + $0x200] sm:$0xff]
        %v268 = vld [vmem:[#allocation5 + $0x208] sm:$0xff]
        %v269 = vld [vmem:[#allocation5 + $0x210] sm:$0xff]
        %v270 = vld [vmem:[#allocation5 + $0x218] sm:$0xff]
        %v271 = vld [vmem:[#allocation5 + $0x220] sm:$0xff]
        %v272 = vld [vmem:[#allocation5 + $0x228] sm:$0xff]
        %v273 = vld [vmem:[#allocation5 + $0x230] sm:$0xff]
        %v274 = vld [vmem:[#allocation5 + $0x238] sm:$0xff]
        %v275 = vld [vmem:[#allocation5 + $0x240] sm:$0xff]
        %v276 = vld [vmem:[#allocation5 + $0x248] sm:$0xff]
        %v277 = vld [vmem:[#allocation5 + $0x250] sm:$0xff]
        %v278 = vld [vmem:[#allocation5 + $0x258] sm:$0xff]
        %v279 = vld [vmem:[#allocation5 + $0x260] sm:$0xff]
        %v280 = vld [vmem:[#allocation5 + $0x268] sm:$0xff]
        %v281 = vld [vmem:[#allocation5 + $0x270] sm:$0xff]
        %v282 = vld [vmem:[#allocation5 + $0x278] sm:$0xff]
        %v283 = vld [vmem:[#allocation5 + $0x280] sm:$0xff]
        %v284 = vld [vmem:[#allocation5 + $0x288] sm:$0xff]
        %v285 = vld [vmem:[#allocation5 + $0x290] sm:$0xff]
        %v286 = vld [vmem:[#allocation5 + $0x298] sm:$0xff]
        %v287 = vld [vmem:[#allocation5 + $0x2a0] sm:$0xff]
        %v288 = vld [vmem:[#allocation5 + $0x2a8] sm:$0xff]
        %v289 = vld [vmem:[#allocation5 + $0x2b0] sm:$0xff]
        %v290 = vld [vmem:[#allocation5 + $0x2b8] sm:$0xff]
        %v291 = vld [vmem:[#allocation5 + $0x2c0] sm:$0xff]
        %v292 = vld [vmem:[#allocation5 + $0x2c8] sm:$0xff]
        %v293 = vld [vmem:[#allocation5 + $0x2d0] sm:$0xff]
        %v294 = vld [vmem:[#allocation5 + $0x2d8] sm:$0xff]
        %v295 = vld [vmem:[#allocation5 + $0x2e0] sm:$0xff]
        %v296 = vld [vmem:[#allocation5 + $0x2e8] sm:$0xff]
        %v297 = vld [vmem:[#allocation5 + $0x2f0] sm:$0xff]
        %v298 = vld [vmem:[#allocation5 + $0x2f8] sm:$0xff]
        %v299 = vld [vmem:[#allocation5 + $0x300] sm:$0xff]
        %v300 = vld [vmem:[#allocation5 + $0x308] sm:$0xff]
        %v301 = vld [vmem:[#allocation5 + $0x310] sm:$0xff]
        %v302 = vld [vmem:[#allocation5 + $0x318] sm:$0xff]
        %v303 = vld [vmem:[#allocation5 + $0x320] sm:$0xff]
        %v304 = vld [vmem:[#allocation5 + $0x328] sm:$0xff]
        %v305 = vld [vmem:[#allocation5 + $0x330] sm:$0xff]
        %v306 = vld [vmem:[#allocation5 + $0x338] sm:$0xff]
        %v307 = vld [vmem:[#allocation5 + $0x340] sm:$0xff]
        %v308 = vld [vmem:[#allocation5 + $0x348] sm:$0xff]
        %v309 = vld [vmem:[#allocation5 + $0x350] sm:$0xff]
        %v310 = vld [vmem:[#allocation5 + $0x358] sm:$0xff]
        %v311 = vld [vmem:[#allocation5 + $0x360] sm:$0xff]
        %v312 = vld [vmem:[#allocation5 + $0x368] sm:$0xff]
        %v313 = vld [vmem:[#allocation5 + $0x370] sm:$0xff]
        %v314 = vld [vmem:[#allocation5 + $0x378] sm:$0xff]
        %v315 = vld [vmem:[#allocation5 + $0x380] sm:$0xff]
        %v316 = vld [vmem:[#allocation5 + $0x388] sm:$0xff]
        %v317 = vld [vmem:[#allocation5 + $0x390] sm:$0xff]
        %v318 = vld [vmem:[#allocation5 + $0x398] sm:$0xff]
        %v319 = vld [vmem:[#allocation5 + $0x3a0] sm:$0xff]
        %v320 = vld [vmem:[#allocation5 + $0x3a8] sm:$0xff]
        %v321 = vld [vmem:[#allocation5 + $0x3b0] sm:$0xff]
        %v322 = vld [vmem:[#allocation5 + $0x3b8] sm:$0xff]
        %v323 = vld [vmem:[#allocation5 + $0x3c0] sm:$0xff]
        %v324 = vld [vmem:[#allocation5 + $0x3c8] sm:$0xff]
        %v325 = vld [vmem:[#allocation5 + $0x3d0] sm:$0xff]
        %v326 = vld [vmem:[#allocation5 + $0x3d8] sm:$0xff]
        %v327 = vld [vmem:[#allocation5 + $0x3e0] sm:$0xff]
        %v328 = vld [vmem:[#allocation5 + $0x3e8] sm:$0xff]
        %v329 = vld [vmem:[#allocation5 + $0x3f0] sm:$0xff]
        %v330 = vld [vmem:[#allocation5 + $0x3f8] sm:$0xff]
        %331 = vmatpush.msra.mxu0 %v323
        %332 = vmatpush.msra.mxu0 %v315
        %333 = vmatpush.msra.mxu0 %v307
        %334 = vmatpush.msra.mxu0 %v299
        %335 = vmatpush.msra.mxu0 %v291
        %336 = vmatpush.msra.mxu0 %v283
        %337 = vmatpush.msra.mxu0 %v275
        %338 = vmatpush.msra.mxu0 %v267
        %339 = vmatpush.msra.mxu0 %v259
        %340 = vmatpush.msra.mxu0 %v251
        %341 = vmatpush.msra.mxu0 %v243
        %342 = vmatpush.msra.mxu0 %v235
        %343 = vmatpush.msra.mxu0 %v227
        %344 = vmatpush.msra.mxu0 %v219
        %345 = vmatpush.msra.mxu0 %v211
        %346 = vmatpush.msra.mxu0 %v203
        %347 = vmatmul.f32.gmra.mxu0 %v202
        %v348 = vpop.f32.mrf.mxu0
        %v349 = vadd.f32 0.0, %v348
        %350 = vdwg.mxu0
        %351 = vmatpush.msra.mxu0 %v324
        %352 = vmatpush.msra.mxu0 %v316
        %353 = vmatpush.msra.mxu0 %v308
        %354 = vmatpush.msra.mxu0 %v300
        %355 = vmatpush.msra.mxu0 %v292
        %356 = vmatpush.msra.mxu0 %v284
        %357 = vmatpush.msra.mxu0 %v276
        %358 = vmatpush.msra.mxu0 %v268
        %359 = vmatpush.msra.mxu0 %v260
        %360 = vmatpush.msra.mxu0 %v252
        %361 = vmatpush.msra.mxu0 %v244
        %362 = vmatpush.msra.mxu0 %v236
        %363 = vmatpush.msra.mxu0 %v228
        %364 = vmatpush.msra.mxu0 %v220
        %365 = vmatpush.msra.mxu0 %v212
        %366 = vmatpush.msra.mxu0 %v204
        %367 = vmatmul.f32.gmra.mxu0 %v202
        %v368 = vpop.f32.mrf.mxu0
        %v369 = vadd.f32 0.0, %v368
        %370 = vdwg.mxu0
        %371 = vmatpush.msra.mxu0 %v325
        %372 = vmatpush.msra.mxu0 %v317
        %373 = vmatpush.msra.mxu0 %v309
        %374 = vmatpush.msra.mxu0 %v301
        %375 = vmatpush.msra.mxu0 %v293
        %376 = vmatpush.msra.mxu0 %v285
        %377 = vmatpush.msra.mxu0 %v277
        %378 = vmatpush.msra.mxu0 %v269
        %379 = vmatpush.msra.mxu0 %v261
        %380 = vmatpush.msra.mxu0 %v253
        %381 = vmatpush.msra.mxu0 %v245
        %382 = vmatpush.msra.mxu0 %v237
        %383 = vmatpush.msra.mxu0 %v229
        %384 = vmatpush.msra.mxu0 %v221
        %385 = vmatpush.msra.mxu0 %v213
        %386 = vmatpush.msra.mxu0 %v205
        %387 = vmatmul.f32.gmra.mxu0 %v202
        %v388 = vpop.f32.mrf.mxu0
        %v389 = vadd.f32 0.0, %v388
        %390 = vdwg.mxu0
        %391 = vmatpush.msra.mxu0 %v326
        %392 = vmatpush.msra.mxu0 %v318
        %393 = vmatpush.msra.mxu0 %v310
        %394 = vmatpush.msra.mxu0 %v302
        %395 = vmatpush.msra.mxu0 %v294
        %396 = vmatpush.msra.mxu0 %v286
        %397 = vmatpush.msra.mxu0 %v278
        %398 = vmatpush.msra.mxu0 %v270
        %399 = vmatpush.msra.mxu0 %v262
        %400 = vmatpush.msra.mxu0 %v254
        %401 = vmatpush.msra.mxu0 %v246
        %402 = vmatpush.msra.mxu0 %v238
        %403 = vmatpush.msra.mxu0 %v230
        %404 = vmatpush.msra.mxu0 %v222
        %405 = vmatpush.msra.mxu0 %v214
        %406 = vmatpush.msra.mxu0 %v206
        %407 = vmatmul.f32.gmra.mxu0 %v202
        %v408 = vpop.f32.mrf.mxu0
        %v409 = vadd.f32 0.0, %v408
        %410 = vdwg.mxu0
        %411 = vmatpush.msra.mxu0 %v327
        %412 = vmatpush.msra.mxu0 %v319
        %413 = vmatpush.msra.mxu0 %v311
        %414 = vmatpush.msra.mxu0 %v303
        %415 = vmatpush.msra.mxu0 %v295
        %416 = vmatpush.msra.mxu0 %v287
        %417 = vmatpush.msra.mxu0 %v279
        %418 = vmatpush.msra.mxu0 %v271
        %419 = vmatpush.msra.mxu0 %v263
        %420 = vmatpush.msra.mxu0 %v255
        %421 = vmatpush.msra.mxu0 %v247
        %422 = vmatpush.msra.mxu0 %v239
        %423 = vmatpush.msra.mxu0 %v231
        %424 = vmatpush.msra.mxu0 %v223
        %425 = vmatpush.msra.mxu0 %v215
        %426 = vmatpush.msra.mxu0 %v207
        %427 = vmatmul.f32.gmra.mxu0 %v202
        %v428 = vpop.f32.mrf.mxu0
        %v429 = vadd.f32 0.0, %v428
        %430 = vdwg.mxu0
        %431 = vmatpush.msra.mxu0 %v328
        %432 = vmatpush.msra.mxu0 %v320
        %433 = vmatpush.msra.mxu0 %v312
        %434 = vmatpush.msra.mxu0 %v304
        %435 = vmatpush.msra.mxu0 %v296
        %436 = vmatpush.msra.mxu0 %v288
        %437 = vmatpush.msra.mxu0 %v280
        %438 = vmatpush.msra.mxu0 %v272
        %439 = vmatpush.msra.mxu0 %v264
        %440 = vmatpush.msra.mxu0 %v256
        %441 = vmatpush.msra.mxu0 %v248
        %442 = vmatpush.msra.mxu0 %v240
        %443 = vmatpush.msra.mxu0 %v232
        %444 = vmatpush.msra.mxu0 %v224
        %445 = vmatpush.msra.mxu0 %v216
        %446 = vmatpush.msra.mxu0 %v208
        %447 = vmatmul.f32.gmra.mxu0 %v202
        %v448 = vpop.f32.mrf.mxu0
        %v449 = vadd.f32 0.0, %v448
        %450 = vdwg.mxu0
        %451 = vmatpush.msra.mxu0 %v329
        %452 = vmatpush.msra.mxu0 %v321
        %453 = vmatpush.msra.mxu0 %v313
        %454 = vmatpush.msra.mxu0 %v305
        %455 = vmatpush.msra.mxu0 %v297
        %456 = vmatpush.msra.mxu0 %v289
        %457 = vmatpush.msra.mxu0 %v281
        %458 = vmatpush.msra.mxu0 %v273
        %459 = vmatpush.msra.mxu0 %v265
        %460 = vmatpush.msra.mxu0 %v257
        %461 = vmatpush.msra.mxu0 %v249
        %462 = vmatpush.msra.mxu0 %v241
        %463 = vmatpush.msra.mxu0 %v233
        %464 = vmatpush.msra.mxu0 %v225
        %465 = vmatpush.msra.mxu0 %v217
        %466 = vmatpush.msra.mxu0 %v209
        %467 = vmatmul.f32.gmra.mxu0 %v202
        %v468 = vpop.f32.mrf.mxu0
        %v469 = vadd.f32 0.0, %v468
        %470 = vdwg.mxu0
        %471 = vmatpush.msra.mxu0 %v330
        %472 = vmatpush.msra.mxu0 %v322
        %473 = vmatpush.msra.mxu0 %v314
        %474 = vmatpush.msra.mxu0 %v306
        %475 = vmatpush.msra.mxu0 %v298
        %476 = vmatpush.msra.mxu0 %v290
        %477 = vmatpush.msra.mxu0 %v282
        %478 = vmatpush.msra.mxu0 %v274
        %479 = vmatpush.msra.mxu0 %v266
        %480 = vmatpush.msra.mxu0 %v258
        %481 = vmatpush.msra.mxu0 %v250
        %482 = vmatpush.msra.mxu0 %v242
        %483 = vmatpush.msra.mxu0 %v234
        %484 = vmatpush.msra.mxu0 %v226
        %485 = vmatpush.msra.mxu0 %v218
        %486 = vmatpush.msra.mxu0 %v210
        %487 = vmatmul.f32.gmra.mxu0 %v202
        %v488 = vpop.f32.mrf.mxu0
        %v489 = vadd.f32 0.0, %v488
        %490 = vdwg.mxu0
        %491 = vst [vmem:[%s199] sm:$0xff] %v349
        %492 = vst [vmem:[%s199 + $0x8] sm:$0xff] %v369
        %493 = vst [vmem:[%s199 + $0x10] sm:$0xff] %v389
        %494 = vst [vmem:[%s199 + $0x18] sm:$0xff] %v409
        %495 = vst [vmem:[%s199 + $0x20] sm:$0xff] %v429
        %496 = vst [vmem:[%s199 + $0x28] sm:$0xff] %v449
        %497 = vst [vmem:[%s199 + $0x30] sm:$0xff] %v469
        %498 = vst [vmem:[%s199 + $0x38] sm:$0xff] %v489
        %s499 = sand.u32 %s94, 1
        %s500 = scalar_lea.sflag [#allocation4], %s499
        %s501 = sand.u32 %s94, 1
        %s502 = smul.addr %s501, 64
        %s503 = scalar_lea.vmem [#allocation7], %s502
        // Predicated region
        $region37: #{tpu_custom_call.1} parent=27 // pred_check
          %p504 = pneg %p104
        $region38: #{tpu_custom_call.1} parent=27 // pred_check_branch
          %506 = sbr.rel (%p504) target = $region40
        $region39: #{tpu_custom_call.1} parent=27 // pred_region
          %s507 = smul.u32 8, %s25
          %509 = vsyncadd %s500, 0
          %s510 = smul.addr %s24, 8
          %s511 = sadd.s32 %s507, %s510
          %s512 = smul.addr %s511, 8
          %s513 = scalar_lea.hbm %s2, %s512
          %s515 = sshll.u32 %s503, 4
          %s516 = int_to_ptr.vmem [resolvable:$true] %s515
          %s517 = sshll.u32 %s513, 4
          %s518 = int_to_ptr.hbm [resolvable:$true] %s517
          %520 = dma.vmem_to_hbm [thread:$0]  %s516, 1024, %s518, %s500
        $region40: #{tpu_custom_call.1} parent=27 // pred_fallthru
          _
      $region28: #{tpu_custom_call.1} parent=5 // pred_fallthru
        _
      %p521 = scmp.le.s32.totalorder 2, %s15
      // Predicated region
      $region41: #{tpu_custom_call.1} parent=5 // pred_check
        %p522 = pneg %p521
      $region42: #{tpu_custom_call.1} parent=5 // pred_check_branch
        %524 = sbr.rel (%p522) target = $region44
      $region43: #{tpu_custom_call.1} parent=5 // pred_region
        %s525 = ssub.s32 %s15, 2
        // Predicated region
        $region45: #{tpu_custom_call.1} parent=43 // pred_check
          %p526 = pneg %p110
        $region46: #{tpu_custom_call.1} parent=43 // pred_check_branch
          %528 = sbr.rel (%p526) target = $region48
        $region47: #{tpu_custom_call.1} parent=43 // pred_region
          %s529 = sand.u32 %s95, 1
          %s530 = scalar_lea.sflag [#allocation4], %s529
          %s531 = sand.u32 %s95, 1
          %s532 = smul.addr %s531, 64
          %s533 = scalar_lea.vmem [#allocation7], %s532
          %535 = dma.done %s530, 1024
        $region48: #{tpu_custom_call.1} parent=43 // pred_fallthru
          _
      $region44: #{tpu_custom_call.1} parent=5 // pred_fallthru
        _
    $region6: #{tpu_custom_call.1} parent=1 // loop_footer
      %s19 = sadd.s32 1, %s15
    $region7: #{tpu_custom_call.1} parent=1 // loop_footer_branch
      %14 = sbr.rel target = $region3
    $region8: #{tpu_custom_call.1} parent=1 // loop_exit
      _
    %536 = vsyncpa [#allocation3], 1
    %s537 = scalar_lea.sflag [#allocation3], 1
    %538 = vsyncpa %s537, 1
    %539 = vsyncpa [#allocation6], 1
    %540 = vsyncpa [#allocation4], 1
    %s541 = scalar_lea.sflag [#allocation4], 1
    %542 = vsyncpa %s541, 1

</llo_original>
